<compile_context>
chip_gen: v6e
topology: v6e:2x2x1
jax: 0.10.0
libtpu: 0.0.40
codegen_flags: <defaults>
</compile_context>

<pallas_src>
import functools
import math

import jax
import jax.numpy as jnp
from jax.experimental import pallas as pl
from jax.experimental.pallas import tpu as pltpu

# FocalLoss hyperparameters (module defaults).
ALPHA = 0.25
GAMMA = 2.0
WEIGHT = 1.0
EPS = 1e-9
SCALE = 1.0
FROM_LOGITS = False
SIZE_AVERAGE = True

LANE = 128
DEFAULT_CHUNK_ROWS = 8192   # reduction-chunk rows/step: 4 MiB f32 pred + 1 MiB int8 label
_TB_TARGET_ROWS = 4096      # batched-samples path: ~2 MiB f32 pred per step
_TB_MAX = 256               # keeps the (tb, 1, 8, 128) partial-sum out blocks small
_SPLIT_MIN_ROWS = 2048      # min rows before the 2-TensorCore reduction split pays off


def _focal_loss_kernel(pred_ref, label_ref, sum_ref, cnt_ref, *,
                       m_rows, chunk_m, needs_mask):
    """One (tb, chunk_m, 128) tile: accumulate partial loss sums and positive
    counts for tb samples into the resident (tb, 1, 8, 128) output blocks."""
    c = pl.program_id(2)

    @pl.when(c == 0)
    def _init():
        sum_ref[...] = jnp.zeros_like(sum_ref)
        cnt_ref[...] = jnp.zeros_like(cnt_ref)

    pred = pred_ref[...].astype(jnp.float32)     # native (f32/bf16) -> f32 in-kernel
    label = label_ref[...].astype(jnp.float32)   # int8 {-1,0,1} -> f32

    p = pred if FROM_LOGITS else jax.nn.sigmoid(pred)
    one_hot = label > 0.0                        # labels in {-1,0,1}: == (label == 1)
    pt = jnp.where(one_hot, p, 1.0 - p)
    t = (label != -1.0).astype(jnp.float32)
    # The leading minus is folded into the select constants; t already carries
    # the (label != -1) sample_weight factor, so the reference's extra
    # loss * sample_weight multiply is a no-op.
    neg_alpha = t * jnp.where(one_hot, -ALPHA, ALPHA - 1.0)
    one_m_pt = 1.0 - pt
    beta = one_m_pt * one_m_pt if GAMMA == 2.0 else one_m_pt ** GAMMA
    loss = neg_alpha * beta * jnp.log(jnp.minimum(pt + EPS, 1.0))
    if WEIGHT != 1.0:
        loss = WEIGHT * loss
    pos = one_hot.astype(jnp.float32)

    if needs_mask:
        # Only compiled in on the no-clean-divisor paths. Rows at or beyond
        # m_rows may hold garbage (even NaN) preds/labels, so mask the *loss*
        # (a select never propagates NaN) and the positive count.
        gc = pl.program_id(1) * pl.num_programs(2) + c        # global chunk index
        row = jax.lax.broadcasted_iota(jnp.int32, loss.shape, 1)
        valid = (gc * chunk_m + row) < m_rows
        loss = jnp.where(valid, loss, 0.0)
        pos = jnp.where(valid, pos, 0.0)

    tb = loss.shape[0]
    if chunk_m % 8 == 0:
        # Keep the 8-sublane structure: the reduction is pure whole-vreg VALU
        # adds (no cross-sublane XLU work); the wrapper folds the 8x128
        # partials per sample.
        k8 = chunk_m // 8
        sum_ref[...] += loss.reshape(tb, k8, 8, LANE).sum(axis=1)[:, None]
        cnt_ref[...] += pos.reshape(tb, k8, 8, LANE).sum(axis=1)[:, None]
    else:
        # chunk_m == M not a multiple of 8 (tiny / odd samples, single chunk):
        # per-lane partial into sublane 0; the rest stays zero from the init.
        sum_ref[:, :, 0:1, :] += jnp.sum(loss, axis=1)[:, None, None, :]
        cnt_ref[:, :, 0:1, :] += jnp.sum(pos, axis=1)[:, None, None, :]


def _plan_tiling(B, M, chunk_rows):
    """Pick (tb, chunk_m, S, C, needs_mask); grid = (cdiv(B, tb), S, C)."""
    chunk_rows = max(32, (chunk_rows // 32) * 32)
    min_div = max(32, (chunk_rows // 8 // 32) * 32)

    # (a) B == 1: split the reduction axis across 2 TensorCores (v7x); on
    #     single-core chips the extra "parallel" axis just iterates serially.
    if B == 1 and M >= _SPLIT_MIN_ROWS:
        C = -(-M // (2 * chunk_rows))                       # chunks per split
        chunk_m = ((-(-M // (2 * C)) + 31) // 32) * 32      # balanced, mult of 32
        if 2 * C * chunk_m == M:
            return 1, chunk_m, 2, C, False
        if M % 64 == 0:   # look for an exact even split to avoid the mask
            d = (min(chunk_rows, M // 2) // 32) * 32
            while d >= min_div:
                if M % d == 0 and (M // d) % 2 == 0:
                    return 1, d, 2, (M // d) // 2, False
                d -= 32
        if (2 * C - 1) * chunk_m < M:                       # last chunk never fully OOB
            return 1, chunk_m, 2, C, True
        # (degenerate corner: fall through to the single-core paths)

    # (b) Short samples: batch several per grid step, one chunk each.
    if M <= chunk_rows:
        tb = max(1, min(B, _TB_TARGET_ROWS // max(M, 1), _TB_MAX))
        return tb, M, 1, 1, False

    # (c) Long samples: one sample per step; prefer a multiple-of-32 chunk that
    #     divides M exactly so the ragged mask is never emitted.
    d = chunk_rows
    while d >= min_div:
        if M % d == 0:
            return 1, d, 1, M // d, False
        d -= 32

    # (d) No acceptable divisor: fixed chunk, ragged last chunk masked in-kernel.
    return 1, chunk_rows, 1, -(-M // chunk_rows), True


def focal_loss(pred, label, *, chunk_rows=DEFAULT_CHUNK_ROWS):
    """Pallas FocalLoss forward.

    pred:  (B, ...) logits, f32 or bf16 (bf16 preferred on HBM-bound v5e).
    label: (B, ...) with values in {-1, 0, 1} (-1 = ignore); shipped as int8.
    Returns (B,) f32.
    """
    B = pred.shape[0]
    n = math.prod(pred.shape[1:])

    pred_flat = pred.reshape(B, n)                         # keep native dtype
    label_flat = label.astype(jnp.int8).reshape(B, n)      # {-1,0,1} -> 1 B/elem

    n_pad = pl.cdiv(n, LANE) * LANE
    if n_pad != n:
        # TODO(synk): fold the lane-tail validity (global index < n) into the
        # in-kernel mask to avoid this HBM round-trip for unaligned sizes.
        pred_flat = jnp.pad(pred_flat, ((0, 0), (0, n_pad - n)))
        label_flat = jnp.pad(label_flat, ((0, 0), (0, n_pad - n)),
                             constant_values=-1)           # -1 => zero contribution
    M = n_pad // LANE
    pred3 = pred_flat.reshape(B, M, LANE)
    label3 = label_flat.reshape(B, M, LANE)

    tb, chunk_m, S, C, needs_mask = _plan_tiling(B, M, chunk_rows)
    nb = pl.cdiv(B, tb)

    kernel = functools.partial(_focal_loss_kernel, m_rows=M, chunk_m=chunk_m,
                               needs_mask=needs_mask)

    part_shape = jax.ShapeDtypeStruct((B, S, 8, LANE), jnp.float32)
    sums, cnts = pl.pallas_call(
        kernel,
        out_shape=(part_shape, part_shape),
        grid_spec=pltpu.PrefetchScalarGridSpec(
            num_scalar_prefetch=0,
            grid=(nb, S, C),
            in_specs=[
                pl.BlockSpec((tb, chunk_m, LANE), lambda b, s, c: (b, s * C + c, 0)),
                pl.BlockSpec((tb, chunk_m, LANE), lambda b, s, c: (b, s * C + c, 0)),
            ],
            out_specs=[
                pl.BlockSpec((tb, 1, 8, LANE), lambda b, s, c: (b, s, 0, 0)),
                pl.BlockSpec((tb, 1, 8, LANE), lambda b, s, c: (b, s, 0, 0)),
            ],
        ),
        compiler_params=pltpu.CompilerParams(
            dimension_semantics=("parallel", "parallel", "arbitrary"),
            vmem_limit_bytes=32 * 1024 * 1024,
        ),
    )(pred3, label3)

    # Tiny finalize in the wrapper: fold the per-(split, sublane, lane)
    # partials, then divide by the positive count (size_average=True).
    total = jnp.sum(sums, axis=(1, 2, 3))
    if SIZE_AVERAGE:
        tsum = jnp.sum(cnts, axis=(1, 2, 3))
        total = total / (tsum + EPS)
    if WEIGHT != 1.0:
        total = WEIGHT * total
    return SCALE * total if SCALE != 1.0 else total


def focal_loss_ref(pred, label):
    """Plain-JAX reference mirroring the PyTorch forward exactly."""
    pred = pred.astype(jnp.float32)
    label = label.astype(jnp.float32)
    p = pred if FROM_LOGITS else jax.nn.sigmoid(pred)
    one_hot = label > 0
    pt = jnp.where(one_hot, p, 1.0 - p)
    t = (label != -1).astype(jnp.float32)
    alpha = jnp.where(one_hot, ALPHA * t, (1.0 - ALPHA) * t)
    beta = (1.0 - pt) ** GAMMA
    loss = -alpha * beta * jnp.log(jnp.minimum(pt + EPS, 1.0))
    sw = (label != -1).astype(jnp.float32)
    loss = WEIGHT * (loss * sw)
    axes = tuple(range(1, pred.ndim))
    loss_sum = jnp.sum(loss, axis=axes)
    if SIZE_AVERAGE:
        tsum = jnp.sum((label == 1).astype(jnp.float32), axis=axes)
        loss_sum = loss_sum / (tsum + EPS)
    return SCALE * loss_sum


def _run_case(key, shape, **kwargs):
    k1, k2 = jax.random.split(key)
    pred = jax.random.normal(k1, shape, dtype=jnp.float32)
    label = jax.random.randint(k2, shape, -1, 2).astype(jnp.float32)
    out = jax.block_until_ready(focal_loss(pred, label, **kwargs))
    ref = focal_loss_ref(pred, label)
    assert out.shape == (shape[0],), (out.shape, shape)
    assert jnp.allclose(out, ref, rtol=1e-4, atol=1e-5), (shape, out, ref)


if __name__ == "__main__":
    keys = jax.random.split(jax.random.PRNGKey(0), 8)
    # main case from the module spec: B=2, C=4, H=W=16 (single step, tb=B)
    _run_case(keys[0], (2, 4, 16, 16))
    # B=1: reduction split across 2 TensorCores, exact chunks (no mask)
    _run_case(keys[1], (1, 1, 512, 512))
    # B=1 split with a ragged, masked last chunk
    _run_case(keys[2], (1, 1, 520, 512))
    # multi-chunk accumulation with ragged mask, tb=1 < B
    _run_case(keys[3], (2, 2, 80, 64), chunk_rows=32)
    # multi-chunk accumulation, exact divisor (no mask)
    _run_case(keys[4], (2, 2, 64, 64), chunk_rows=32)
    # N not a multiple of 128 (lane padding) and chunk_m % 8 != 0 fallback
    _run_case(keys[5], (2, 3, 7, 11))
    # tiny per-sample size, tb == B
    _run_case(keys[6], (9, 1, 8, 16))
    # batch larger than the batch tile (ragged trailing batch block)
    _run_case(keys[7], (300, 1, 1, 128))
    print("KERNEL_OK")
</pallas_src>

<mosaic_0001>
module attributes {stable_mosaic.version = 11 : i64} {
  func.func @_focal_loss_kernel(%arg0: i32, %arg1: i32, %arg2: i32, %arg3: memref<2x8x128xf32, #tpu.memory_space<vmem>>, %arg4: memref<2x8x128xi8, #tpu.memory_space<vmem>>, %arg5: memref<2x1x8x128xf32, #tpu.memory_space<vmem>>, %arg6: memref<2x1x8x128xf32, #tpu.memory_space<vmem>>) attributes {dimension_semantics = [#tpu.dimension_semantics<parallel>, #tpu.dimension_semantics<parallel>, #tpu.dimension_semantics<arbitrary>], iteration_bounds = array<i64: 1, 1, 1>, scalar_prefetch = 0 : i64, scratch_operands = 0 : i64, tpu.core_type = #tpu.core_type<tc>, window_params = [{transform_indices = @transform_0, window_bounds = array<i64: 2, 8, 128>}, {transform_indices = @transform_1, window_bounds = array<i64: 2, 8, 128>}, {transform_indices = @transform_2, window_bounds = array<i64: 2, 1, 8, 128>}, {transform_indices = @transform_3, window_bounds = array<i64: 2, 1, 8, 128>}]} {
    %c0_i32 = arith.constant 0 : i32
    %0 = arith.cmpi eq, %arg2, %c0_i32 : i32
    %1 = arith.extui %0 : i1 to i32
    %c0_i32_0 = arith.constant 0 : i32
    %2 = arith.cmpi ne, %1, %c0_i32_0 : i32
    scf.if %2 {
      %cst_32 = arith.constant 0.000000e+00 : f32
      %48 = vector.broadcast %cst_32 : f32 to vector<2x1x8x128xf32>
      %c0_33 = arith.constant 0 : index
      %c0_34 = arith.constant 0 : index
      %c0_35 = arith.constant 0 : index
      %c0_36 = arith.constant 0 : index
      %49 = vector.load %arg5[%c0_33, %c0_34, %c0_35, %c0_36] : memref<2x1x8x128xf32, #tpu.memory_space<vmem>>, vector<2x1x8x128xf32>
      tpu.vector_store %arg5[%c0_33, %c0_34, %c0_35, %c0_36], %48 {strides = array<i32>} : memref<2x1x8x128xf32, #tpu.memory_space<vmem>>, vector<2x1x8x128xf32>,
      %cst_37 = arith.constant 0.000000e+00 : f32
      %50 = vector.broadcast %cst_37 : f32 to vector<2x1x8x128xf32>
      %c0_38 = arith.constant 0 : index
      %c0_39 = arith.constant 0 : index
      %c0_40 = arith.constant 0 : index
      %c0_41 = arith.constant 0 : index
      %51 = vector.load %arg6[%c0_38, %c0_39, %c0_40, %c0_41] : memref<2x1x8x128xf32, #tpu.memory_space<vmem>>, vector<2x1x8x128xf32>
      tpu.vector_store %arg6[%c0_38, %c0_39, %c0_40, %c0_41], %50 {strides = array<i32>} : memref<2x1x8x128xf32, #tpu.memory_space<vmem>>, vector<2x1x8x128xf32>,
    } else {
    }
    %c0 = arith.constant 0 : index
    %c0_1 = arith.constant 0 : index
    %c0_2 = arith.constant 0 : index
    %3 = vector.load %arg3[%c0, %c0_1, %c0_2] : memref<2x8x128xf32, #tpu.memory_space<vmem>>, vector<2x8x128xf32>
    %c0_3 = arith.constant 0 : index
    %c0_4 = arith.constant 0 : index
    %c0_5 = arith.constant 0 : index
    %4 = vector.load %arg4[%c0_3, %c0_4, %c0_5] : memref<2x8x128xi8, #tpu.memory_space<vmem>>, vector<2x8x128xi8>
    %5 = arith.sitofp %4 : vector<2x8x128xi8> to vector<2x8x128xf32>
    %6 = arith.negf %3 : vector<2x8x128xf32>
    %7 = math.exp %6 : vector<2x8x128xf32>
    %cst = arith.constant 1.000000e+00 : f32
    %8 = vector.broadcast %cst : f32 to vector<2x8x128xf32>
    %9 = arith.addf %8, %7 : vector<2x8x128xf32>
    %10 = arith.divf %8, %9 : vector<2x8x128xf32>
    %cst_6 = arith.constant 0.000000e+00 : f32
    %11 = vector.broadcast %cst_6 : f32 to vector<2x8x128xf32>
    %12 = arith.cmpf ogt, %5, %11 : vector<2x8x128xf32>
    %cst_7 = arith.constant 1.000000e+00 : f32
    %13 = vector.broadcast %cst_7 : f32 to vector<2x8x128xf32>
    %14 = arith.subf %13, %10 : vector<2x8x128xf32>
    %15 = arith.select %12, %10, %14 : vector<2x8x128xi1>, vector<2x8x128xf32>
    %cst_8 = arith.constant -1.000000e+00 : f32
    %16 = vector.broadcast %cst_8 : f32 to vector<2x8x128xf32>
    %17 = arith.cmpf one, %5, %16 : vector<2x8x128xf32>
    %18 = arith.extui %17 : vector<2x8x128xi1> to vector<2x8x128xi32>
    %19 = arith.sitofp %18 : vector<2x8x128xi32> to vector<2x8x128xf32>
    %cst_9 = arith.constant -2.500000e-01 : f32
    %cst_10 = arith.constant -7.500000e-01 : f32
    %20 = vector.broadcast %cst_9 : f32 to vector<2x8x128xf32>
    %21 = vector.broadcast %cst_10 : f32 to vector<2x8x128xf32>
    %22 = arith.select %12, %20, %21 : vector<2x8x128xi1>, vector<2x8x128xf32>
    %23 = arith.mulf %19, %22 : vector<2x8x128xf32>
    %cst_11 = arith.constant 1.000000e+00 : f32
    %24 = vector.broadcast %cst_11 : f32 to vector<2x8x128xf32>
    %25 = arith.subf %24, %15 : vector<2x8x128xf32>
    %26 = arith.mulf %25, %25 : vector<2x8x128xf32>
    %27 = arith.mulf %23, %26 : vector<2x8x128xf32>
    %cst_12 = arith.constant 9.99999971E-10 : f32
    %28 = vector.broadcast %cst_12 : f32 to vector<2x8x128xf32>
    %29 = arith.addf %15, %28 : vector<2x8x128xf32>
    %cst_13 = arith.constant 1.000000e+00 : f32
    %30 = vector.broadcast %cst_13 : f32 to vector<2x8x128xf32>
    %31 = arith.minimumf %29, %30 : vector<2x8x128xf32>
    %32 = math.log %31 : vector<2x8x128xf32>
    %33 = arith.mulf %27, %32 : vector<2x8x128xf32>
    %34 = arith.extui %12 : vector<2x8x128xi1> to vector<2x8x128xi32>
    %35 = arith.sitofp %34 : vector<2x8x128xi32> to vector<2x8x128xf32>
    %c0_14 = arith.constant 0 : index
    %c0_15 = arith.constant 0 : index
    %c0_16 = arith.constant 0 : index
    %c0_17 = arith.constant 0 : index
    %36 = vector.load %arg5[%c0_14, %c0_15, %c0_16, %c0_17] : memref<2x1x8x128xf32, #tpu.memory_space<vmem>>, vector<2x1x8x128xf32>
    %37 = vector.shape_cast %33 : vector<2x8x128xf32> to vector<2x1x8x128xf32>
    %cst_18 = arith.constant dense<0.000000e+00> : vector<2x8x128xf32>
    %38 = vector.multi_reduction <add>, %37, %cst_18 [1] : vector<2x1x8x128xf32> to vector<2x8x128xf32>
    %39 = vector.shape_cast %38 : vector<2x8x128xf32> to vector<2x1x8x128xf32>
    %40 = arith.addf %36, %39 : vector<2x1x8x128xf32>
    %c0_19 = arith.constant 0 : index
    %c0_20 = arith.constant 0 : index
    %c0_21 = arith.constant 0 : index
    %c0_22 = arith.constant 0 : index
    %41 = vector.load %arg5[%c0_19, %c0_20, %c0_21, %c0_22] : memref<2x1x8x128xf32, #tpu.memory_space<vmem>>, vector<2x1x8x128xf32>
    tpu.vector_store %arg5[%c0_19, %c0_20, %c0_21, %c0_22], %40 {strides = array<i32>} : memref<2x1x8x128xf32, #tpu.memory_space<vmem>>, vector<2x1x8x128xf32>,
    %c0_23 = arith.constant 0 : index
    %c0_24 = arith.constant 0 : index
    %c0_25 = arith.constant 0 : index
    %c0_26 = arith.constant 0 : index
    %42 = vector.load %arg6[%c0_23, %c0_24, %c0_25, %c0_26] : memref<2x1x8x128xf32, #tpu.memory_space<vmem>>, vector<2x1x8x128xf32>
    %43 = vector.shape_cast %35 : vector<2x8x128xf32> to vector<2x1x8x128xf32>
    %cst_27 = arith.constant dense<0.000000e+00> : vector<2x8x128xf32>
    %44 = vector.multi_reduction <add>, %43, %cst_27 [1] : vector<2x1x8x128xf32> to vector<2x8x128xf32>
    %45 = vector.shape_cast %44 : vector<2x8x128xf32> to vector<2x1x8x128xf32>
    %46 = arith.addf %42, %45 : vector<2x1x8x128xf32>
    %c0_28 = arith.constant 0 : index
    %c0_29 = arith.constant 0 : index
    %c0_30 = arith.constant 0 : index
    %c0_31 = arith.constant 0 : index
    %47 = vector.load %arg6[%c0_28, %c0_29, %c0_30, %c0_31] : memref<2x1x8x128xf32, #tpu.memory_space<vmem>>, vector<2x1x8x128xf32>
    tpu.vector_store %arg6[%c0_28, %c0_29, %c0_30, %c0_31], %46 {strides = array<i32>} : memref<2x1x8x128xf32, #tpu.memory_space<vmem>>, vector<2x1x8x128xf32>,
    return
  }
  func.func @transform_0(%arg0: i32, %arg1: i32, %arg2: i32) -> (i32, i32, i32) {
    %c1_i32 = arith.constant 1 : i32
    %0 = arith.muli %arg1, %c1_i32 : i32
    %1 = arith.addi %0, %arg2 : i32
    %c0_i32 = arith.constant 0 : i32
    %c0_i32_0 = arith.constant 0 : i32
    return %arg0, %1, %c0_i32 : i32, i32, i32
  }
  func.func @transform_1(%arg0: i32, %arg1: i32, %arg2: i32) -> (i32, i32, i32) {
    %c1_i32 = arith.constant 1 : i32
    %0 = arith.muli %arg1, %c1_i32 : i32
    %1 = arith.addi %0, %arg2 : i32
    %c0_i32 = arith.constant 0 : i32
    %c0_i32_0 = arith.constant 0 : i32
    return %arg0, %1, %c0_i32 : i32, i32, i32
  }
  func.func @transform_2(%arg0: i32, %arg1: i32, %arg2: i32) -> (i32, i32, i32, i32) {
    %c0_i32 = arith.constant 0 : i32
    %c0_i32_0 = arith.constant 0 : i32
    %c0_i32_1 = arith.constant 0 : i32
    return %arg0, %arg1, %c0_i32, %c0_i32_0 : i32, i32, i32, i32
  }
  func.func @transform_3(%arg0: i32, %arg1: i32, %arg2: i32) -> (i32, i32, i32, i32) {
    %c0_i32 = arith.constant 0 : i32
    %c0_i32_0 = arith.constant 0 : i32
    %c0_i32_1 = arith.constant 0 : i32
    return %arg0, %arg1, %c0_i32, %c0_i32_0 : i32, i32, i32, i32
  }
}

</mosaic_0001>

<llo_original>
// kernel: tpu_custom_call.1
$region0: #{tpu_custom_call.1}
  #allocation0 [shape = 'u32[]', space=smem, size = 0x4, offset = 0x4, fixed_abs, tag = 'smem constant byte address 0x4 - core index']
  #allocation1 [shape = 'u32[144,128]{1,0:T(1,128)}', space=vmem, size = 0x12000, scoped, tag = 'internal scratch']
  %s0 = inlined_call_operand.hbm [shape: f32[2,8,128], index: 0, kind: input, shape index: {}]
  %s1 = inlined_call_operand.hbm [shape: s8[2,8,128], index: 1, kind: input, shape index: {}]
  %s2 = inlined_call_operand.hbm [shape: f32[2,1,8,128], index: 2, kind: output, shape index: {0}]
  %s3 = inlined_call_operand.hbm [shape: f32[2,1,8,128], index: 3, kind: output, shape index: {1}]
  %4 = xla_tuple %s2, %s3
  %s5 = sld [smem:[#allocation0]]
  $region38: #{tpu_custom_call.1} parent=0
    _
  %s7 = ssub.s32 1, %s5
  %s8 = scalar_select 0, %s7, %s5
  $region1: #{tpu_custom_call.1} parent=0
    #allocation2 [shape = 'u8[8192]{0}', space=vmem, size = 0x2000, scoped, tag = 'input window, operand 0, single buffered']
    #allocation3 [shape = 's32[1]{0}', space=sflag, size = 0x4, scoped, tag = 'scoped memory for tpu_custom_call.1']
    #allocation4 [shape = 's32[1]{0}', space=sflag, size = 0x4, scoped, tag = 'scoped memory for tpu_custom_call.1']
    #allocation5 [shape = 'u8[2048]{0}', space=vmem, size = 0x800, scoped, tag = 'input window, operand 1, single buffered']
    #allocation6 [shape = 's32[1]{0}', space=sflag, size = 0x4, scoped, tag = 'scoped memory for tpu_custom_call.1']
    #allocation7 [shape = 'u8[8192]{0}', space=vmem, size = 0x2000, scoped, tag = 'output window, operand 0, single buffered']
    #allocation8 [shape = 'u8[8192]{0}', space=vmem, size = 0x2000, scoped, tag = 'output window, operand 1, single buffered']
    #allocation9 [shape = 's32[1]{0}', space=sflag, size = 0x4, scoped, tag = 'scoped memory for tpu_custom_call.1']
    %9 = vsyncpa [#allocation3], 0
    %10 = vsyncpa [#allocation6], 0
    %11 = vsyncpa [#allocation4], 0
    %12 = vsyncpa [#allocation9], 0
    // Predicated region
    $region2: #{tpu_custom_call.1} parent=1 // pred_check
      _
    $region3: #{tpu_custom_call.1} parent=1 // pred_check_branch
      %14 = sbr.rel (0) target = $region5
    $region4: #{tpu_custom_call.1} parent=1 // pred_region
      %s15 = sadd.s32 0, 0
      %s17 = ssub.s32 256, 256
      %18 = vsyncadd [#allocation3], %s17
      %s19 = smul.addr %s15, 128
      %s20 = scalar_lea.hbm %s0, %s19
      %s21 = sshll.u32 [#allocation2], 4
      %s22 = int_to_ptr.vmem [resolvable:$true] %s21
      %27 = dma.hbm_to_vmem [thread:$0]  %s20, 256, %s22, [#allocation3], 128, 128, 8
    $region5: #{tpu_custom_call.1} parent=1 // pred_fallthru
      _
    // Predicated region
    $region6: #{tpu_custom_call.1} parent=1 // pred_check
      _
    $region7: #{tpu_custom_call.1} parent=1 // pred_check_branch
      %29 = sbr.rel (0) target = $region9
    $region8: #{tpu_custom_call.1} parent=1 // pred_region
      %s30 = sadd.s32 0, 0
      %s32 = ssub.s32 64, 64
      %33 = vsyncadd [#allocation6], %s32
      %s34 = smul.addr %s30, 32
      %s35 = scalar_lea.hbm %s1, %s34
      %s36 = sshll.u32 [#allocation5], 4
      %s37 = int_to_ptr.vmem [resolvable:$true] %s36
      %42 = dma.hbm_to_vmem [thread:$0]  %s35, 64, %s37, [#allocation6], 32, 32, 2
    $region9: #{tpu_custom_call.1} parent=1 // pred_fallthru
      _
    // Predicated region
    $region10: #{tpu_custom_call.1} parent=1 // pred_check
      _
    $region11: #{tpu_custom_call.1} parent=1 // pred_check_branch
      %44 = sbr.rel (0) target = $region13
    $region12: #{tpu_custom_call.1} parent=1 // pred_region
      %45 = dma.done [#allocation3], 256
    $region13: #{tpu_custom_call.1} parent=1 // pred_fallthru
      _
    // Predicated region
    $region14: #{tpu_custom_call.1} parent=1 // pred_check
      _
    $region15: #{tpu_custom_call.1} parent=1 // pred_check_branch
      %47 = sbr.rel (0) target = $region17
    $region16: #{tpu_custom_call.1} parent=1 // pred_region
      %48 = dma.done [#allocation6], 64
    $region17: #{tpu_custom_call.1} parent=1 // pred_fallthru
      _
    %s49 = sadd.s32 0, 0
    %s50 = sadd.s32 0, 0
    %p51 = scmp.eq.s32.totalorder 0, 0
    // Predicated region
    $region18: #{tpu_custom_call.1} parent=1 // pred_check
      %p52 = pneg %p51
    $region19: #{tpu_custom_call.1} parent=1 // pred_check_branch
      %54 = sbr.rel (%p52) target = $region21
    $region20: #{tpu_custom_call.1} parent=1 // pred_region
      %55 = vst [vmem:[#allocation7] sm:$0xff] 0.0
      %56 = vst [vmem:[#allocation7 + $0x8] sm:$0xff] 0.0
      %57 = vst [vmem:[#allocation8] sm:$0xff] 0.0
      %58 = vst [vmem:[#allocation8 + $0x8] sm:$0xff] 0.0
    $region21: #{tpu_custom_call.1} parent=1 // pred_fallthru
      _
    %v59 = vld [vmem:[#allocation2] sm:$0xff]
    %v60 = vld [vmem:[#allocation2 + $0x8] sm:$0xff]
    %v61 = vld [vmem:[#allocation5] sm:$0x3]
    %v62 = vld [vmem:[#allocation5 + $0x2] sm:$0x3]
    %v63 = vunpack.c.0.s8 %v61
    %v64 = vunpack.c.0.s8 %v62
    %v65 = vcvt.s32.f32 %v63
    %v66 = vcvt.s32.f32 %v64
    %v67 = vxor.u32 %v59, 2147483648
    %v68 = vxor.u32 %v60, 2147483648
    %v69 = vmul.f32 %v67, 1.442695
    %v70 = vpow.pop %v69
    %v71 = vmul.f32 %v68, 1.442695
    %v72 = vpow.pop %v71
    %v73 = vadd.f32 %v70, 1.0
    %v74 = vadd.f32 %v72, 1.0
    %v75 = vrcp.pop %v73
    %v76 = vmul.f32 1.0, %v75
    %v77 = vrcp.pop %v74
    %v78 = vmul.f32 1.0, %v77
    %vm79 = vcmp.gt.f32.partialorder %v65, 0.0
    %vm80 = vcmp.gt.f32.partialorder %v66, 0.0
    %v81 = vsub.f32 1.0, %v76
    %v82 = vsub.f32 1.0, %v78
    %v83 = vsel %vm79, %v76, %v81
    %v84 = vsel %vm80, %v78, %v82
    %vm85 = vcmp.ne.f32.partialorder %v65, -1.0
    %vm86 = vcmp.ne.f32.partialorder %v66, -1.0
    %v87 = vsel %vm85, 1, 0
    %v88 = vsel %vm86, 1, 0
    %v89 = vcvt.s32.f32 %v87
    %v90 = vcvt.s32.f32 %v88
    %v91 = vsel %vm79, -0.25, -0.75
    %v92 = vsel %vm80, -0.25, -0.75
    %v93 = vmul.f32 %v89, %v91
    %v94 = vmul.f32 %v90, %v92
    %v95 = vsub.f32 1.0, %v83
    %v96 = vsub.f32 1.0, %v84
    %v97 = vmul.f32 %v95, %v95
    %v98 = vmul.f32 %v96, %v96
    %v99 = vmul.f32 %v93, %v97
    %v100 = vmul.f32 %v94, %v98
    %v101 = vadd.f32 %v83, 1e-09
    %v102 = vadd.f32 %v84, 1e-09
    %v103 = vmin.f32 %v101, 1.0
    %v104 = vmin.f32 %v102, 1.0
    %v105 = vlog2.pop %v103
    %v106 = vmul.f32 %v105, 0.6931472
    %v107 = vlog2.pop %v104
    %v108 = vmul.f32 %v107, 0.6931472
    %v109 = vmul.f32 %v99, %v106
    %v110 = vmul.f32 %v100, %v108
    %v111 = vsel %vm79, 1, 0
    %v112 = vsel %vm80, 1, 0
    %v113 = vcvt.s32.f32 %v111
    %v114 = vcvt.s32.f32 %v112
    %v115 = vld [vmem:[#allocation7] sm:$0xff]
    %v116 = vld [vmem:[#allocation7 + $0x8] sm:$0xff]
    %v117 = vadd.f32 %v109, 0.0
    %v118 = vadd.f32 %v110, 0.0
    %v119 = vadd.f32 %v115, %v117
    %v120 = vadd.f32 %v116, %v118
    %121 = vst [vmem:[#allocation7] sm:$0xff] %v119
    %122 = vst [vmem:[#allocation7 + $0x8] sm:$0xff] %v120
    %v123 = vld [vmem:[#allocation8] sm:$0xff]
    %v124 = vld [vmem:[#allocation8 + $0x8] sm:$0xff]
    %v125 = vadd.f32 %v113, 0.0
    %v126 = vadd.f32 %v114, 0.0
    %v127 = vadd.f32 %v123, %v125
    %v128 = vadd.f32 %v124, %v126
    %129 = vst [vmem:[#allocation8] sm:$0xff] %v127
    %130 = vst [vmem:[#allocation8 + $0x8] sm:$0xff] %v128
    // Predicated region
    $region22: #{tpu_custom_call.1} parent=1 // pred_check
      _
    $region23: #{tpu_custom_call.1} parent=1 // pred_check_branch
      %132 = sbr.rel (0) target = $region25
    $region24: #{tpu_custom_call.1} parent=1 // pred_region
      %s134 = ssub.s32 256, 256
      %135 = vsyncadd [#allocation4], %s134
      %s136 = sshll.u32 [#allocation7], 4
      %s137 = int_to_ptr.vmem [resolvable:$true] %s136
      %142 = dma.vmem_to_hbm [thread:$0]  %s137, 256, %s2, [#allocation4], 128, 128, 8
    $region25: #{tpu_custom_call.1} parent=1 // pred_fallthru
      _
    // Predicated region
    $region26: #{tpu_custom_call.1} parent=1 // pred_check
      _
    $region27: #{tpu_custom_call.1} parent=1 // pred_check_branch
      %144 = sbr.rel (0) target = $region29
    $region28: #{tpu_custom_call.1} parent=1 // pred_region
      %s146 = ssub.s32 256, 256
      %147 = vsyncadd [#allocation9], %s146
      %s148 = sshll.u32 [#allocation8], 4
      %s149 = int_to_ptr.vmem [resolvable:$true] %s148
      %154 = dma.vmem_to_hbm [thread:$0]  %s149, 256, %s3, [#allocation9], 128, 128, 8
    $region29: #{tpu_custom_call.1} parent=1 // pred_fallthru
      _
    // Predicated region
    $region30: #{tpu_custom_call.1} parent=1 // pred_check
      _
    $region31: #{tpu_custom_call.1} parent=1 // pred_check_branch
      %156 = sbr.rel (0) target = $region33
    $region32: #{tpu_custom_call.1} parent=1 // pred_region
      %157 = dma.done [#allocation4], 256
    $region33: #{tpu_custom_call.1} parent=1 // pred_fallthru
      _
    // Predicated region
    $region34: #{tpu_custom_call.1} parent=1 // pred_check
      _
    $region35: #{tpu_custom_call.1} parent=1 // pred_check_branch
      %159 = sbr.rel (0) target = $region37
    $region36: #{tpu_custom_call.1} parent=1 // pred_region
      %160 = dma.done [#allocation9], 256
    $region37: #{tpu_custom_call.1} parent=1 // pred_fallthru
      _
    %161 = vsyncpa [#allocation3], 1
    %162 = vsyncpa [#allocation6], 1
    %163 = vsyncpa [#allocation4], 1
    %164 = vsyncpa [#allocation9], 1

</llo_original>
